<compile_context>
chip_gen: v6e
topology: v6e:2x2x1
jax: 0.10.0
libtpu: 0.0.40
codegen_flags: <defaults>
</compile_context>

<pallas_src>
import jax
import jax.numpy as jnp
from jax.experimental import pallas as pl
from jax.experimental.pallas import tpu as pltpu


def _round_up(a: int, m: int) -> int:
    return (a + m - 1) // m * m


def _cdiv(a: int, b: int) -> int:
    return (a + b - 1) // b


def _balanced_tile(total: int, cap: int, align: int) -> int:
    """Largest tile <= cap (multiple of `align`) keeping padding < one tile."""
    if total <= cap:
        return _round_up(total, align)
    n_tiles = _cdiv(total, cap)
    return _round_up(_cdiv(total, n_tiles), align)


def _vmem_bytes(tb: int, tn: int, tk: int) -> int:
    # double-buffered inputs + double-buffered output + f32 accumulator scratch
    return 4 * (2 * tb * tk + 2 * tk * tn + 2 * tb + 2 * tn + 2 * tb * tn + tb * tn)


def _vmem_budget_bytes() -> int:
    try:
        cap = pltpu.get_tpu_info().vmem_capacity_bytes
    except Exception:
        cap = 64 * 1024 * 1024  # conservative fallback (v7x per-TC VMEM)
    return int(cap * 0.75)      # leave compiler-scratch headroom


def _proto_dist_kernel(xsq_ref, psq_ref, x_ref, pt_ref, o_ref, acc_ref):
    # xsq_ref: (TB, 1)   precomputed ||x||^2 (f32)
    # psq_ref: (1, TN)   precomputed ||p||^2 (f32)
    # x_ref:   (TB, TK)  input rows, K-slice
    # pt_ref:  (TK, TN)  prototypes (transposed), K-slice
    # o_ref:   (TB, TN)  distances
    # acc_ref: (TB, TN)  f32 accumulator for the cross term
    k = pl.program_id(2)

    @pl.when(k == 0)
    def _():
        acc_ref[...] = jnp.zeros_like(acc_ref)

    acc_ref[...] += jnp.dot(x_ref[...], pt_ref[...],
                            preferred_element_type=jnp.float32)       # MXU

    @pl.when(k == pl.num_programs(2) - 1)
    def _():
        sq = xsq_ref[...] + psq_ref[...] - 2.0 * acc_ref[...]
        sq = jnp.maximum(sq, 0.0)                                     # fp cancellation guard
        o_ref[...] = jnp.sqrt(sq).astype(o_ref.dtype)


def prototype_layer(x: jnp.ndarray, prototypes: jnp.ndarray,
                    *, tb_cap: int = 512, tn_cap: int = 1024,
                    tk_cap: int = 1024) -> jnp.ndarray:
    """x: (B, D); prototypes: (N, D)  ->  (B, N) L2 distances."""
    B, D = x.shape
    N, D2 = prototypes.shape
    assert D == D2, (D, D2)

    # --- VMEM-budgeted tile caps (generation aware) ---------------------------
    budget = _vmem_budget_bytes()
    while _vmem_bytes(tb_cap, tn_cap, tk_cap) > budget and tk_cap > 128:
        tk_cap //= 2
    while _vmem_bytes(tb_cap, tn_cap, tk_cap) > budget and tn_cap > 128:
        tn_cap //= 2
    while _vmem_bytes(tb_cap, tn_cap, tk_cap) > budget and tb_cap > 8:
        tb_cap //= 2

    # --- Balanced tiles (padding < one tile) ----------------------------------
    TB = _balanced_tile(B, tb_cap, 8)
    TN = _balanced_tile(N, tn_cap, 128)
    TK = D if D <= tk_cap else _balanced_tile(D, tk_cap, 128)

    B_pad = _round_up(B, TB)
    N_pad = _round_up(N, TN)
    D_pad = _round_up(D, TK)

    # v7x megacore: ensure >=2 steps on a parallel axis when the problem allows.
    if B_pad // TB == 1 and N_pad // TN == 1:
        if B >= 16:
            TB = _round_up(_cdiv(B, 2), 8)
            B_pad = _round_up(B, TB)
        elif N >= 256:
            TN = _round_up(_cdiv(N, 2), 128)
            N_pad = _round_up(N, TN)

    # --- Host-side prep (zero-pad; precompute norms in f32) -------------------
    # NOTE: transpose/pad/norm of the prototype matrix is O(N*D) prep; if this
    # layer is called repeatedly with frozen prototypes, hoist it out of the
    # per-call hot path (store the parameter in (D, N) layout).
    x_p = x
    if (B_pad, D_pad) != (B, D):
        x_p = jnp.pad(x, ((0, B_pad - B), (0, D_pad - D)))
    p_t = prototypes.T                                                 # (D, N)
    if (D_pad, N_pad) != (D, N):
        p_t = jnp.pad(p_t, ((0, D_pad - D), (0, N_pad - N)))
    x_sq = jnp.sum(jnp.square(x_p.astype(jnp.float32)), axis=-1, keepdims=True)  # (B_pad, 1)
    p_sq = jnp.sum(jnp.square(p_t.astype(jnp.float32)), axis=0, keepdims=True)   # (1, N_pad)

    gi, gj, gk = B_pad // TB, N_pad // TN, D_pad // TK

    vmem_limit = min(budget, max(32 * 1024 * 1024, 2 * _vmem_bytes(TB, TN, TK)))

    out = pl.pallas_call(
        _proto_dist_kernel,
        out_shape=jax.ShapeDtypeStruct((B_pad, N_pad), x.dtype),
        grid_spec=pltpu.PrefetchScalarGridSpec(
            num_scalar_prefetch=0,
            grid=(gi, gj, gk),
            in_specs=[
                pl.BlockSpec((TB, 1), lambda i, j, k: (i, 0)),    # ||x||^2
                pl.BlockSpec((1, TN), lambda i, j, k: (0, j)),    # ||p||^2
                pl.BlockSpec((TB, TK), lambda i, j, k: (i, k)),   # x tile
                pl.BlockSpec((TK, TN), lambda i, j, k: (k, j)),   # prototype tile
            ],
            out_specs=pl.BlockSpec((TB, TN), lambda i, j, k: (i, j)),
            scratch_shapes=[pltpu.VMEM((TB, TN), jnp.float32)],
        ),
        compiler_params=pltpu.CompilerParams(
            dimension_semantics=("parallel", "parallel", "arbitrary"),
            vmem_limit_bytes=int(vmem_limit),
        ),
        cost_estimate=pl.CostEstimate(
            flops=2 * B_pad * D_pad * N_pad + 4 * B_pad * N_pad,
            transcendentals=B_pad * N_pad,                        # sqrt
            bytes_accessed=4 * (gj * B_pad * D_pad               # x re-streamed per j
                                + gi * D_pad * N_pad             # protos re-streamed per i
                                + B_pad * N_pad + B_pad + N_pad),
        ),
    )(x_sq, p_sq, x_p, p_t)

    # TODO(synk): if ever differentiated, use a custom VJP (sqrt grad blows up at 0),
    # or expose the squared-distance output and fuse sqrt into the consumer.
    return out[:B, :N]


def _reference(x, prototypes):
    diffs = x[:, None, :] - prototypes[None, :, :]
    return jnp.sqrt(jnp.sum(diffs * diffs, axis=-1))


if __name__ == "__main__":
    key = jax.random.PRNGKey(0)

    # Small shapes consistent with the module: input_dim=32, num_prototypes=16.
    B, D, N = 8, 32, 16
    kx, kp = jax.random.split(key)
    x = jax.random.normal(kx, (B, D), dtype=jnp.float32)
    prototypes = jax.random.normal(kp, (N, D), dtype=jnp.float32)

    out = jax.block_until_ready(prototype_layer(x, prototypes))
    ref = _reference(x, prototypes)
    assert out.shape == (B, N), out.shape
    assert jnp.allclose(out, ref, atol=1e-4, rtol=1e-4), "mismatch vs reference (small)"

    # Second check: awkward sizes + forced K-tiling to exercise padding and the
    # accumulator path (grid k > 1).
    B2, D2, N2 = 20, 300, 130
    kx2, kp2 = jax.random.split(jax.random.PRNGKey(1))
    x2 = jax.random.normal(kx2, (B2, D2), dtype=jnp.float32)
    p2 = jax.random.normal(kp2, (N2, D2), dtype=jnp.float32)
    out2 = jax.block_until_ready(prototype_layer(x2, p2, tk_cap=128))
    ref2 = _reference(x2, p2)
    assert out2.shape == (B2, N2), out2.shape
    assert jnp.allclose(out2, ref2, atol=1e-3, rtol=1e-3), "mismatch vs reference (ktiled)"

    print("KERNEL_OK")
</pallas_src>

<mosaic_0001>
module attributes {stable_mosaic.version = 11 : i64} {
  func.func @_proto_dist_kernel(%arg0: i32, %arg1: i32, %arg2: i32, %arg3: memref<8x1xf32, #tpu.memory_space<vmem>>, %arg4: memref<1x128xf32, #tpu.memory_space<vmem>>, %arg5: memref<8x32xf32, #tpu.memory_space<vmem>>, %arg6: memref<32x128xf32, #tpu.memory_space<vmem>>, %arg7: memref<8x128xf32, #tpu.memory_space<vmem>>, %arg8: memref<8x128xf32, #tpu.memory_space<vmem>>) attributes {dimension_semantics = [#tpu.dimension_semantics<parallel>, #tpu.dimension_semantics<parallel>, #tpu.dimension_semantics<arbitrary>], iteration_bounds = array<i64: 1, 1, 1>, scalar_prefetch = 0 : i64, scratch_operands = 1 : i64, tpu.core_type = #tpu.core_type<tc>, window_params = [{transform_indices = @transform_0, window_bounds = array<i64: 8, 1>}, {transform_indices = @transform_1, window_bounds = array<i64: 1, 128>}, {transform_indices = @transform_2, window_bounds = array<i64: 8, 32>}, {transform_indices = @transform_3, window_bounds = array<i64: 32, 128>}, {transform_indices = @transform_4, window_bounds = array<i64: 8, 128>}]} {
    %c0_i32 = arith.constant 0 : i32
    %0 = arith.cmpi eq, %arg2, %c0_i32 : i32
    %1 = arith.extui %0 : i1 to i32
    %c0_i32_0 = arith.constant 0 : i32
    %2 = arith.cmpi ne, %1, %c0_i32_0 : i32
    scf.if %2 {
      %cst_10 = arith.constant 0.000000e+00 : f32
      %12 = vector.broadcast %cst_10 : f32 to vector<8x128xf32>
      %c0_11 = arith.constant 0 : index
      %c0_12 = arith.constant 0 : index
      %13 = vector.load %arg8[%c0_11, %c0_12] : memref<8x128xf32, #tpu.memory_space<vmem>>, vector<8x128xf32>
      tpu.vector_store %arg8[%c0_11, %c0_12], %12 {strides = array<i32>} : memref<8x128xf32, #tpu.memory_space<vmem>>, vector<8x128xf32>,
    } else {
    }
    %c0 = arith.constant 0 : index
    %c0_1 = arith.constant 0 : index
    %3 = vector.load %arg8[%c0, %c0_1] : memref<8x128xf32, #tpu.memory_space<vmem>>, vector<8x128xf32>
    %c0_2 = arith.constant 0 : index
    %c0_3 = arith.constant 0 : index
    %4 = vector.load %arg5[%c0_2, %c0_3] : memref<8x32xf32, #tpu.memory_space<vmem>>, vector<8x32xf32>
    %c0_4 = arith.constant 0 : index
    %c0_5 = arith.constant 0 : index
    %5 = vector.load %arg6[%c0_4, %c0_5] : memref<32x128xf32, #tpu.memory_space<vmem>>, vector<32x128xf32>
    %cst = arith.constant dense<0.000000e+00> : vector<8x128xf32>
    %6 = tpu.matmul %4, %5, %cst {dimension_numbers = #tpu.dot_dimension_numbers<[1], [0], [0], [1], [0, 0, 1, 1], [], []>} : vector<8x32xf32>, vector<32x128xf32>, vector<8x128xf32> -> vector<8x128xf32>
    %7 = arith.addf %3, %6 : vector<8x128xf32>
    %c0_6 = arith.constant 0 : index
    %c0_7 = arith.constant 0 : index
    %8 = vector.load %arg8[%c0_6, %c0_7] : memref<8x128xf32, #tpu.memory_space<vmem>>, vector<8x128xf32>
    tpu.vector_store %arg8[%c0_6, %c0_7], %7 {strides = array<i32>} : memref<8x128xf32, #tpu.memory_space<vmem>>, vector<8x128xf32>,
    %c0_i32_8 = arith.constant 0 : i32
    %9 = arith.cmpi eq, %arg2, %c0_i32_8 : i32
    %10 = arith.extui %9 : i1 to i32
    %c0_i32_9 = arith.constant 0 : i32
    %11 = arith.cmpi ne, %10, %c0_i32_9 : i32
    scf.if %11 {
      %c0_10 = arith.constant 0 : index
      %c0_11 = arith.constant 0 : index
      %12 = vector.load %arg3[%c0_10, %c0_11] : memref<8x1xf32, #tpu.memory_space<vmem>>, vector<8x1xf32>
      %c0_12 = arith.constant 0 : index
      %c0_13 = arith.constant 0 : index
      %13 = vector.load %arg4[%c0_12, %c0_13] : memref<1x128xf32, #tpu.memory_space<vmem>>, vector<1x128xf32>
      %14 = vector.broadcast %12 : vector<8x1xf32> to vector<8x128xf32>
      %15 = vector.broadcast %13 : vector<1x128xf32> to vector<8x128xf32>
      %16 = arith.addf %14, %15 : vector<8x128xf32>
      %c0_14 = arith.constant 0 : index
      %c0_15 = arith.constant 0 : index
      %17 = vector.load %arg8[%c0_14, %c0_15] : memref<8x128xf32, #tpu.memory_space<vmem>>, vector<8x128xf32>
      %cst_16 = arith.constant 2.000000e+00 : f32
      %18 = vector.broadcast %cst_16 : f32 to vector<8x128xf32>
      %19 = arith.mulf %18, %17 : vector<8x128xf32>
      %20 = arith.subf %16, %19 : vector<8x128xf32>
      %cst_17 = arith.constant 0.000000e+00 : f32
      %21 = vector.broadcast %cst_17 : f32 to vector<8x128xf32>
      %22 = arith.maximumf %20, %21 : vector<8x128xf32>
      %23 = math.sqrt %22 : vector<8x128xf32>
      %c0_18 = arith.constant 0 : index
      %c0_19 = arith.constant 0 : index
      %24 = vector.load %arg7[%c0_18, %c0_19] : memref<8x128xf32, #tpu.memory_space<vmem>>, vector<8x128xf32>
      tpu.vector_store %arg7[%c0_18, %c0_19], %23 {strides = array<i32>} : memref<8x128xf32, #tpu.memory_space<vmem>>, vector<8x128xf32>,
    } else {
    }
    return
  }
  func.func @transform_0(%arg0: i32, %arg1: i32, %arg2: i32) -> (i32, i32) {
    %c0_i32 = arith.constant 0 : i32
    %c0_i32_0 = arith.constant 0 : i32
    return %arg0, %c0_i32 : i32, i32
  }
  func.func @transform_1(%arg0: i32, %arg1: i32, %arg2: i32) -> (i32, i32) {
    %c0_i32 = arith.constant 0 : i32
    %c0_i32_0 = arith.constant 0 : i32
    return %c0_i32, %arg1 : i32, i32
  }
  func.func @transform_2(%arg0: i32, %arg1: i32, %arg2: i32) -> (i32, i32) {
    %c0_i32 = arith.constant 0 : i32
    return %arg0, %arg2 : i32, i32
  }
  func.func @transform_3(%arg0: i32, %arg1: i32, %arg2: i32) -> (i32, i32) {
    %c0_i32 = arith.constant 0 : i32
    return %arg2, %arg1 : i32, i32
  }
  func.func @transform_4(%arg0: i32, %arg1: i32, %arg2: i32) -> (i32, i32) {
    %c0_i32 = arith.constant 0 : i32
    return %arg0, %arg1 : i32, i32
  }
}

</mosaic_0001>

<llo_original>
// kernel: tpu_custom_call.1
$region0: #{tpu_custom_call.1}
  #allocation0 [shape = 'u32[]', space=smem, size = 0x4, offset = 0x4, fixed_abs, tag = 'smem constant byte address 0x4 - core index']
  #allocation1 [shape = 'u32[144,128]{1,0:T(1,128)}', space=vmem, size = 0x12000, scoped, tag = 'internal scratch']
  #allocation2 [shape = 'f32[8,128]{1,0:T(8,128)}', space=vmem, size = 0x1000, scoped, tag = 'scratch operand']
  %s0 = inlined_call_operand.vmem [shape: f32[8,1], index: 0, kind: input, shape index: {}]
  %s1 = inlined_call_operand.vmem [shape: f32[1,128], index: 1, kind: input, shape index: {}]
  %s2 = inlined_call_operand.vmem [shape: f32[8,32], index: 2, kind: input, shape index: {}]
  %s3 = inlined_call_operand.hbm [shape: f32[32,128], index: 3, kind: input, shape index: {}]
  %s4 = inlined_call_operand.hbm [shape: f32[8,128], index: 4, kind: output, shape index: {}]
  %s5 = sld [smem:[#allocation0]]
  $region38: #{tpu_custom_call.1} parent=0
    _
  %s7 = ssub.s32 1, %s5
  %s8 = scalar_select 0, %s7, %s5
  $region1: #{tpu_custom_call.1} parent=0
    #allocation3 [shape = 'u8[16384]{0}', space=vmem, size = 0x4000, scoped, tag = 'input window, operand 3, single buffered']
    #allocation4 [shape = 's32[1]{0}', space=sflag, size = 0x4, scoped, tag = 'scoped memory for tpu_custom_call.1']
    #allocation5 [shape = 's32[1]{0}', space=sflag, size = 0x4, scoped, tag = 'scoped memory for tpu_custom_call.1']
    #allocation6 [shape = 'u8[4096]{0}', space=vmem, size = 0x1000, scoped, tag = 'output window, operand 0, single buffered']
    %9 = vsyncpa [#allocation4], 0
    %10 = vsyncpa [#allocation5], 0
    // Predicated region
    $region2: #{tpu_custom_call.1} parent=1 // pred_check
      _
    $region3: #{tpu_custom_call.1} parent=1 // pred_check_branch
      %12 = sbr.rel (0) target = $region5
    $region4: #{tpu_custom_call.1} parent=1 // pred_region
      _
    $region5: #{tpu_custom_call.1} parent=1 // pred_fallthru
      _
    // Predicated region
    $region6: #{tpu_custom_call.1} parent=1 // pred_check
      _
    $region7: #{tpu_custom_call.1} parent=1 // pred_check_branch
      %14 = sbr.rel (0) target = $region9
    $region8: #{tpu_custom_call.1} parent=1 // pred_region
      _
    $region9: #{tpu_custom_call.1} parent=1 // pred_fallthru
      _
    // Predicated region
    $region10: #{tpu_custom_call.1} parent=1 // pred_check
      _
    $region11: #{tpu_custom_call.1} parent=1 // pred_check_branch
      %16 = sbr.rel (0) target = $region13
    $region12: #{tpu_custom_call.1} parent=1 // pred_region
      _
    $region13: #{tpu_custom_call.1} parent=1 // pred_fallthru
      _
    // Predicated region
    $region14: #{tpu_custom_call.1} parent=1 // pred_check
      _
    $region15: #{tpu_custom_call.1} parent=1 // pred_check_branch
      %18 = sbr.rel (0) target = $region17
    $region16: #{tpu_custom_call.1} parent=1 // pred_region
      %s20 = ssub.s32 512, 512
      %21 = vsyncadd [#allocation4], %s20
      %s22 = sshll.u32 [#allocation3], 4
      %s23 = int_to_ptr.vmem [resolvable:$true] %s22
      %28 = dma.hbm_to_vmem [thread:$0]  %s3, 512, %s23, [#allocation4], 128, 128, 8
    $region17: #{tpu_custom_call.1} parent=1 // pred_fallthru
      _
    // Predicated region
    $region18: #{tpu_custom_call.1} parent=1 // pred_check
      _
    $region19: #{tpu_custom_call.1} parent=1 // pred_check_branch
      %30 = sbr.rel (0) target = $region21
    $region20: #{tpu_custom_call.1} parent=1 // pred_region
      %31 = dma.done [#allocation4], 512
    $region21: #{tpu_custom_call.1} parent=1 // pred_fallthru
      _
    %p32 = scmp.eq.s32.totalorder 0, 0
    // Predicated region
    $region22: #{tpu_custom_call.1} parent=1 // pred_check
      %p33 = pneg %p32
    $region23: #{tpu_custom_call.1} parent=1 // pred_check_branch
      %35 = sbr.rel (%p33) target = $region25
    $region24: #{tpu_custom_call.1} parent=1 // pred_region
      %36 = vst [vmem:[#allocation2] sm:$0xff] 0.0
    $region25: #{tpu_custom_call.1} parent=1 // pred_fallthru
      _
    %v37 = vld [vmem:[#allocation2] sm:$0xff]
    %v38 = vld [vmem:[%s2] sm:$0xff]
    %v39 = vld [vmem:[#allocation3] sm:$0xff]
    %v40 = vld [vmem:[#allocation3 + $0x8] sm:$0xff]
    %v41 = vld [vmem:[#allocation3 + $0x10] sm:$0xff]
    %v42 = vld [vmem:[#allocation3 + $0x18] sm:$0xff]
    %vm43 = vcmask 261120
    %v45 = vsel %vm43, %v38, 0
    %47 = vmatprep.subr.mxu0 0.0
    %48 = vmatpush1.msra.mxu0 0.0
    %49 = vmatprep.subr.mxu0 0.0
    %50 = vmatpush1.msra.mxu0 0.0
    %51 = vmatprep.subr.mxu0 0.0
    %52 = vmatpush1.msra.mxu0 0.0
    %53 = vmatprep.subr.mxu0 0.0
    %54 = vmatpush1.msra.mxu0 0.0
    %55 = vmatprep.subr.mxu0 0.0
    %56 = vmatpush1.msra.mxu0 0.0
    %57 = vmatprep.subr.mxu0 0.0
    %58 = vmatpush1.msra.mxu0 0.0
    %59 = vmatprep.subr.mxu0 0.0
    %60 = vmatpush1.msra.mxu0 0.0
    %61 = vmatprep.subr.mxu0 0.0
    %62 = vmatpush1.msra.mxu0 0.0
    %63 = vmatprep.subr.mxu0 0.0
    %64 = vmatpush1.msra.mxu0 0.0
    %65 = vmatprep.subr.mxu0 0.0
    %66 = vmatpush1.msra.mxu0 0.0
    %67 = vmatprep.subr.mxu0 0.0
    %68 = vmatpush1.msra.mxu0 0.0
    %69 = vmatprep.subr.mxu0 0.0
    %70 = vmatpush1.msra.mxu0 0.0
    %71 = vmatprep.subr.mxu0 0.0
    %72 = vmatpush1.msra.mxu0 %v42
    %73 = vmatprep.subr.mxu0 0.0
    %74 = vmatpush1.msra.mxu0 %v41
    %75 = vmatprep.subr.mxu0 0.0
    %76 = vmatpush1.msra.mxu0 %v40
    %77 = vmatprep.subr.mxu0 0.0
    %78 = vmatpush1.msra.mxu0 %v39
    %79 = vmatprep.subr.mxu0 0.0
    %80 = vmatpush2.msra.mxu0 0.0
    %81 = vmatprep.subr.mxu0 0.0
    %82 = vmatpush2.msra.mxu0 0.0
    %83 = vmatprep.subr.mxu0 0.0
    %84 = vmatpush2.msra.mxu0 0.0
    %85 = vmatprep.subr.mxu0 0.0
    %86 = vmatpush2.msra.mxu0 0.0
    %87 = vmatprep.subr.mxu0 0.0
    %88 = vmatpush2.msra.mxu0 0.0
    %89 = vmatprep.subr.mxu0 0.0
    %90 = vmatpush2.msra.mxu0 0.0
    %91 = vmatprep.subr.mxu0 0.0
    %92 = vmatpush2.msra.mxu0 0.0
    %93 = vmatprep.subr.mxu0 0.0
    %94 = vmatpush2.msra.mxu0 0.0
    %95 = vmatprep.subr.mxu0 0.0
    %96 = vmatpush2.msra.mxu0 0.0
    %97 = vmatprep.subr.mxu0 0.0
    %98 = vmatpush2.msra.mxu0 0.0
    %99 = vmatprep.subr.mxu0 0.0
    %100 = vmatpush2.msra.mxu0 0.0
    %101 = vmatprep.subr.mxu0 0.0
    %102 = vmatpush2.msra.mxu0 0.0
    %103 = vmatprep.subr.mxu0 0.0
    %104 = vmatpush2.msra.mxu0 0.0
    %105 = vmatprep.subr.mxu0 0.0
    %106 = vmatpush2.msra.mxu0 0.0
    %107 = vmatprep.subr.mxu0 0.0
    %108 = vmatpush2.msra.mxu0 0.0
    %109 = vmatprep.subr.mxu0 0.0
    %110 = vmatpush2.msra.mxu0 0.0
    %111 = vmatprep.mubr.f32.mxu0 0.0
    %112 = vmatmul.mubr.f32.gmra.mxu0 %v45
    %v113 = vpop.f32.mrf.mxu0
    %v114 = vadd.f32 0.0, %v113
    %v115 = vpop.f32.mrf.mxu0
    %116 = vdwg.mxu0
    %v117 = vadd.f32 %v37, %v114
    %118 = vst [vmem:[#allocation2] sm:$0xff] %v117
    // Predicated region
    $region26: #{tpu_custom_call.1} parent=1 // pred_check
      %p119 = pneg %p32
    $region27: #{tpu_custom_call.1} parent=1 // pred_check_branch
      %121 = sbr.rel (%p119) target = $region29
    $region28: #{tpu_custom_call.1} parent=1 // pred_region
      %v122 = vld [vmem:[%s0] sm:$0xff]
      %v123 = vld [vmem:[%s1] sm:$0x1]
      %125 = vset.pattern.permute.xlu0 0
      %126 = vperm.xlu0 %125, %v122
      %v127 = vpop.permute.xlu0 %126
      %v130 = vlaneseq
      %v131 = vshrl.u32 %v130, 7
      %v132 = vsub.s32 0, %v131
      %v133 = vrot.slane %v123, %v132
      %v135 = vadd.f32 %v127, %v133
      %v136 = vld [vmem:[#allocation2] sm:$0xff]
      %v137 = vmul.f32 %v136, 2.0
      %v138 = vsub.f32 %v135, %v137
      %v139 = vmax.f32 %v138, 0.0
      %v140 = vrsqrt.pop %v139
      %v141 = vmul.f32 %v139, %v140
      %vm142 = vcmp.eq.f32.partialorder %v139, inf
      %v143 = vsel %vm142, %v139, %v141
      %vm144 = vcmp.eq.f32.partialorder %v139, 0.0
      %v145 = vand.u32 %v139, 2147483648
      %v146 = vsel %vm144, %v145, %v143
      %147 = vst [vmem:[#allocation6] sm:$0xff] %v146
    $region29: #{tpu_custom_call.1} parent=1 // pred_fallthru
      _
    // Predicated region
    $region30: #{tpu_custom_call.1} parent=1 // pred_check
      _
    $region31: #{tpu_custom_call.1} parent=1 // pred_check_branch
      %149 = sbr.rel (0) target = $region33
    $region32: #{tpu_custom_call.1} parent=1 // pred_region
      %s151 = ssub.s32 128, 128
      %152 = vsyncadd [#allocation5], %s151
      %s154 = sshll.u32 [#allocation6], 4
      %s155 = int_to_ptr.vmem [resolvable:$true] %s154
      %157 = dma.vmem_to_hbm [thread:$0]  %s155, 128, %s4, [#allocation5]
    $region33: #{tpu_custom_call.1} parent=1 // pred_fallthru
      _
    // Predicated region
    $region34: #{tpu_custom_call.1} parent=1 // pred_check
      _
    $region35: #{tpu_custom_call.1} parent=1 // pred_check_branch
      %159 = sbr.rel (0) target = $region37
    $region36: #{tpu_custom_call.1} parent=1 // pred_region
      %160 = dma.done [#allocation5], 128
    $region37: #{tpu_custom_call.1} parent=1 // pred_fallthru
      _
    %161 = vsyncpa [#allocation4], 1
    %162 = vsyncpa [#allocation5], 1

</llo_original>
